<compile_context>
chip_gen: v7x
topology: tpu7x:2x2x1
jax: 0.10.0
libtpu: 0.0.40
codegen_flags: <defaults>
</compile_context>

<pallas_src>
import functools

import jax
import jax.numpy as jnp
from jax.experimental import pallas as pl
from jax.experimental.pallas import tpu as pltpu

_GRAY_COEFFS = (65.738, 129.057, 25.064)
_LANES = 128


def _round_up(n, m):
    return ((n + m - 1) // m) * m


def _sublane_pack(dtype):
    """Rows per packed sublane tile for this dtype: f32->8, bf16->16, int8->32."""
    return 8 * max(1, 4 // jnp.dtype(dtype).itemsize)


def _vmem_budget_and_limit():
    """(tile-sizing budget, compiler scoped-VMEM limit) in bytes for this chip."""
    phys = None
    try:
        info = pltpu.get_tpu_info()
        for name in ("vmem_capacity_bytes", "vmem_size_bytes", "vmem_bytes"):
            v = getattr(info, name, None)
            if isinstance(v, int) and v > 0:
                phys = v
                break
    except Exception:
        phys = None
    if phys is None:
        phys = 64 << 20  # v7x per-TC physical VMEM; safe lower bound for v5e/v6e
    limit = min(phys - (8 << 20), 100 << 20)   # raise the 16/32 MiB scoped default
    budget = min(int(phys * 0.60), 80 << 20)   # what tiles are sized against
    return budget, int(limit)


def _grad_layer_kernel(x_ref, halo_ref, o_ref, *, coeffs):
    """One (batch, H-tile) block.

    x_ref    : (1, C, TH, W)  input tile (native dtype)
    halo_ref : (1, 1, 8, W)   f32; row 0 = gray image row just above this tile,
                              row 1 = gray image row just below (zeros at the
                              image borders); rows 2..7 are alignment padding.
    o_ref    : (1, 1, TH, W)  gradient-magnitude tile
    """
    C = len(coeffs)
    TH, W = x_ref.shape[2], x_ref.shape[3]

    # Gray conversion (weighted channel sum), accumulated in f32.
    g = coeffs[0] * x_ref[0, 0].astype(jnp.float32)
    for c in range(1, C):
        g = g + coeffs[c] * x_ref[0, c].astype(jnp.float32)

    top = halo_ref[0, 0, 0:1, :]      # (1, W) row above the tile (0 at image top)
    bot = halo_ref[0, 0, 1:2, :]      # (1, W) row below the tile (0 at image bottom)

    # Interior central differences via circular XLU rolls.  Only the squares are
    # used, so the sign of the circular difference is irrelevant; wrap-around
    # rows / columns are overwritten exactly below.
    gv = pltpu.roll(g, shift=TH - 1, axis=0) - pltpu.roll(g, shift=1, axis=0)
    gh = pltpu.roll(g, shift=W - 1, axis=1) - pltpu.roll(g, shift=1, axis=1)

    # Boundary fixups: masks are built from (TH,1)/(1,W) iotas so no full (TH,W)
    # index tensors stay live, and edge values are single rows / columns.
    row = jax.lax.broadcasted_iota(jnp.int32, (TH, 1), 0)
    col = jax.lax.broadcasted_iota(jnp.int32, (1, W), 1)
    gv = jnp.where(row == 0, g[1:2, :] - top, gv)
    gv = jnp.where(row == TH - 1, bot - g[TH - 2:TH - 1, :], gv)
    gh = jnp.where(col == 0, g[:, 1:2], gh)                 # x[:, -1] = 0 pad
    gh = jnp.where(col == W - 1, -g[:, W - 2:W - 1], gh)    # x[:, W]  = 0 pad

    o_ref[0, 0] = jnp.sqrt(gv * gv + gh * gh + jnp.float32(1e-6)).astype(o_ref.dtype)


def grad_layer(x, *, out_dtype=None, tile_rows=None):
    """Pallas implementation of GradLayer.forward(x).  x: (N, C, H, W)."""
    N, C, H, W = x.shape
    if C == 3:
        coeffs = tuple(float(v) / 256.0 for v in _GRAY_COEFFS)
    elif C == 1:
        coeffs = (1.0,)
    else:
        raise ValueError("GradLayer expects 1 or 3 input channels.")
    if out_dtype is None:
        out_dtype = x.dtype if jnp.issubdtype(x.dtype, jnp.floating) else jnp.float32

    in_bytes = jnp.dtype(x.dtype).itemsize
    out_bytes = jnp.dtype(out_dtype).itemsize
    align = max(_sublane_pack(x.dtype), _sublane_pack(out_dtype))

    # Lane-dense width: pad W to a multiple of 128 so the XLU roll path and
    # unmasked full-width stores are always used.
    W_pad = _round_up(W, _LANES)

    budget, vmem_limit = _vmem_budget_and_limit()
    if tile_rows is None:
        # Double-buffered input + output pipeline plus ~6 live f32 body temps.
        per_px = 2 * C * in_bytes + 2 * out_bytes + 6 * 4
        TH = max(align, (budget // (per_px * W_pad)) // align * align)
    else:
        TH = _round_up(int(tile_rows), align)
    TH = min(TH, _round_up(H, align))
    if N == 1:
        # Keep >= 2 grid steps so both TensorCores (v7x) / megacore get work.
        half = _round_up(-(-H // 2), align)
        if half < TH:
            TH = half
    n_t = -(-H // TH)
    H_pad = n_t * TH

    # Zero-pad H/W if needed (zero padding reproduces conv2d(padding=1) at the
    # bottom/right borders; padded output rows/cols are sliced off afterwards).
    if (H_pad, W_pad) != (H, W):
        x_p = jnp.pad(x, ((0, 0), (0, 0), (0, H_pad - H), (0, W_pad - W)))
    else:
        x_p = x

    # Halo: for every H-tile, the gray-converted image row just above and just
    # below it (zeros at the image borders).  Sublane dim padded 2 -> 8 so the
    # block is tile-aligned; extra HBM traffic is ~2/TH of the image and it
    # makes every (b, t) grid step fully independent.
    cvec = jnp.asarray(coeffs, jnp.float32).reshape(1, C, 1, 1)

    def _gray_rows(rows):                       # (N, C, k, W_pad) -> (N, k, W_pad)
        return jnp.sum(rows.astype(jnp.float32) * cvec, axis=1)

    zrow = jnp.zeros((N, 1, W_pad), jnp.float32)
    if n_t > 1:
        above = _gray_rows(x_p[:, :, TH - 1::TH, :][:, :, : n_t - 1, :])
        below = _gray_rows(x_p[:, :, TH::TH, :][:, :, : n_t - 1, :])
        top = jnp.concatenate([zrow, above], axis=1)           # (N, n_t, W_pad)
        bot = jnp.concatenate([below, zrow], axis=1)           # (N, n_t, W_pad)
    else:
        top = zrow
        bot = zrow
    halo = jnp.zeros((N, n_t, 8, W_pad), jnp.float32)
    halo = halo.at[:, :, 0, :].set(top)
    halo = halo.at[:, :, 1, :].set(bot)

    kernel = functools.partial(_grad_layer_kernel, coeffs=coeffs)

    out = pl.pallas_call(
        kernel,
        out_shape=jax.ShapeDtypeStruct((N, 1, H_pad, W_pad), out_dtype),
        grid=(N, n_t),
        in_specs=[
            pl.BlockSpec((1, C, TH, W_pad), lambda b, t: (b, 0, t, 0)),
            pl.BlockSpec((1, 1, 8, W_pad), lambda b, t: (b, t, 0, 0)),
        ],
        out_specs=pl.BlockSpec((1, 1, TH, W_pad), lambda b, t: (b, 0, t, 0)),
        compiler_params=pltpu.CompilerParams(
            dimension_semantics=("parallel", "parallel"),
            vmem_limit_bytes=vmem_limit),
    )(x_p, halo)

    if (H_pad, W_pad) != (H, W):
        out = out[:, :, :H, :W]
    return out


def _reference_grad_layer(x):
    """Pure-JAX reference matching the PyTorch GradLayer (sanity check)."""
    x = x.astype(jnp.float32)
    if x.shape[1] == 3:
        c = jnp.array(_GRAY_COEFFS, jnp.float32) / 256.0
        x = jnp.sum(x * c[None, :, None, None], axis=1, keepdims=True)
    xp = jnp.pad(x, ((0, 0), (0, 0), (1, 1), (1, 1)))
    x_v = xp[:, :, 2:, 1:-1] - xp[:, :, :-2, 1:-1]
    x_h = xp[:, :, 1:-1, 2:] - xp[:, :, 1:-1, :-2]
    return jnp.sqrt(x_v * x_v + x_h * x_h + 1e-6)


if __name__ == "__main__":
    key = jax.random.PRNGKey(0)
    k1, k2, k3, k4 = jax.random.split(key, 4)

    # 1) RGB f32, lane-dense W = 128, auto (VMEM-budgeted) tile sizing.
    x1 = jax.random.uniform(k1, (2, 3, 16, 128), dtype=jnp.float32)
    y1 = jax.block_until_ready(grad_layer(x1))
    r1 = _reference_grad_layer(x1)
    assert y1.shape == (2, 1, 16, 128) and y1.dtype == jnp.float32
    assert jnp.allclose(y1, r1, rtol=1e-5, atol=1e-5), float(jnp.max(jnp.abs(y1 - r1)))

    # 2) RGB f32 with forced H-tiling (4 tiles per image -> exercises the halo path).
    x2 = jax.random.uniform(k2, (2, 3, 32, 128), dtype=jnp.float32)
    y2 = jax.block_until_ready(grad_layer(x2, tile_rows=8))
    r2 = _reference_grad_layer(x2)
    assert jnp.allclose(y2, r2, rtol=1e-5, atol=1e-5), float(jnp.max(jnp.abs(y2 - r2)))

    # 3) Awkward sizes: W not a multiple of 128, H not a multiple of the tile
    #    (exercises wrapper padding, the remainder tile and output slicing).
    x3 = jax.random.uniform(k3, (1, 3, 17, 100), dtype=jnp.float32)
    y3 = jax.block_until_ready(grad_layer(x3))
    r3 = _reference_grad_layer(x3)
    assert y3.shape == (1, 1, 17, 100)
    assert jnp.allclose(y3, r3, rtol=1e-5, atol=1e-5), float(jnp.max(jnp.abs(y3 - r3)))

    # 4) Single-channel bf16 input with dtype-matched bf16 output (halved HBM
    #    write bytes); f32 accumulation inside the kernel.
    x4 = jax.random.uniform(k4, (1, 1, 32, 128), dtype=jnp.float32).astype(jnp.bfloat16)
    y4 = jax.block_until_ready(grad_layer(x4))
    r4 = _reference_grad_layer(x4)
    assert y4.dtype == jnp.bfloat16 and y4.shape == (1, 1, 32, 128)
    assert jnp.allclose(y4.astype(jnp.float32), r4, rtol=2e-2, atol=2e-2)

    print("KERNEL_OK")
</pallas_src>

<mosaic_0001>
module attributes {stable_mosaic.version = 11 : i64} {
  func.func @_grad_layer_kernel(%arg0: i32, %arg1: i32, %arg2: memref<1x3x16x128xf32, #tpu.memory_space<vmem>>, %arg3: memref<1x1x8x128xf32, #tpu.memory_space<vmem>>, %arg4: memref<1x1x16x128xf32, #tpu.memory_space<vmem>>) attributes {dimension_semantics = [#tpu.dimension_semantics<parallel>, #tpu.dimension_semantics<parallel>], iteration_bounds = array<i64: 2, 1>, scalar_prefetch = 0 : i64, scratch_operands = 0 : i64, tpu.core_type = #tpu.core_type<tc>, window_params = [{transform_indices = @transform_0, window_bounds = array<i64: 1, 3, 16, 128>}, {transform_indices = @transform_1, window_bounds = array<i64: 1, 1, 8, 128>}, {transform_indices = @transform_2, window_bounds = array<i64: 1, 1, 16, 128>}]} {
    %c0 = arith.constant 0 : index
    %c0_0 = arith.constant 0 : index
    %c0_1 = arith.constant 0 : index
    %c0_2 = arith.constant 0 : index
    %0 = vector.load %arg2[%c0, %c0_0, %c0_1, %c0_2] : memref<1x3x16x128xf32, #tpu.memory_space<vmem>>, vector<1x1x16x128xf32>
    %1 = vector.shape_cast %0 : vector<1x1x16x128xf32> to vector<16x128xf32>
    %cst = arith.constant 0.256789058 : f32
    %2 = vector.broadcast %cst : f32 to vector<16x128xf32>
    %3 = arith.mulf %2, %1 : vector<16x128xf32>
    %c0_3 = arith.constant 0 : index
    %c1 = arith.constant 1 : index
    %c0_4 = arith.constant 0 : index
    %c0_5 = arith.constant 0 : index
    %4 = vector.load %arg2[%c0_3, %c1, %c0_4, %c0_5] : memref<1x3x16x128xf32, #tpu.memory_space<vmem>>, vector<1x1x16x128xf32>
    %5 = vector.shape_cast %4 : vector<1x1x16x128xf32> to vector<16x128xf32>
    %cst_6 = arith.constant 0.504128933 : f32
    %6 = vector.broadcast %cst_6 : f32 to vector<16x128xf32>
    %7 = arith.mulf %6, %5 : vector<16x128xf32>
    %8 = arith.addf %3, %7 : vector<16x128xf32>
    %c0_7 = arith.constant 0 : index
    %c2 = arith.constant 2 : index
    %c0_8 = arith.constant 0 : index
    %c0_9 = arith.constant 0 : index
    %9 = vector.load %arg2[%c0_7, %c2, %c0_8, %c0_9] : memref<1x3x16x128xf32, #tpu.memory_space<vmem>>, vector<1x1x16x128xf32>
    %10 = vector.shape_cast %9 : vector<1x1x16x128xf32> to vector<16x128xf32>
    %cst_10 = arith.constant 0.0979062467 : f32
    %11 = vector.broadcast %cst_10 : f32 to vector<16x128xf32>
    %12 = arith.mulf %11, %10 : vector<16x128xf32>
    %13 = arith.addf %8, %12 : vector<16x128xf32>
    %c0_11 = arith.constant 0 : index
    %c0_12 = arith.constant 0 : index
    %c0_13 = arith.constant 0 : index
    %c0_14 = arith.constant 0 : index
    %14 = vector.load %arg3[%c0_11, %c0_12, %c0_13, %c0_14] : memref<1x1x8x128xf32, #tpu.memory_space<vmem>>, vector<1x1x1x128xf32>
    %15 = vector.shape_cast %14 : vector<1x1x1x128xf32> to vector<1x128xf32>
    %c0_15 = arith.constant 0 : index
    %c0_16 = arith.constant 0 : index
    %c1_17 = arith.constant 1 : index
    %c0_18 = arith.constant 0 : index
    %16 = vector.load %arg3[%c0_15, %c0_16, %c1_17, %c0_18] : memref<1x1x8x128xf32, #tpu.memory_space<vmem>>, vector<1x1x1x128xf32>
    %17 = vector.shape_cast %16 : vector<1x1x1x128xf32> to vector<1x128xf32>
    %c15_i32 = arith.constant 15 : i32
    %18 = tpu.dynamic_rotate %13 by %c15_i32 dim 0 : vector<16x128xf32>, i32 -> vector<16x128xf32>
    %c1_i32 = arith.constant 1 : i32
    %19 = tpu.dynamic_rotate %13 by %c1_i32 dim 0 : vector<16x128xf32>, i32 -> vector<16x128xf32>
    %20 = arith.subf %18, %19 : vector<16x128xf32>
    %c127_i32 = arith.constant 127 : i32
    %21 = tpu.dynamic_rotate %13 by %c127_i32 dim 1 : vector<16x128xf32>, i32 -> vector<16x128xf32>
    %c1_i32_19 = arith.constant 1 : i32
    %22 = tpu.dynamic_rotate %13 by %c1_i32_19 dim 1 : vector<16x128xf32>, i32 -> vector<16x128xf32>
    %23 = arith.subf %21, %22 : vector<16x128xf32>
    %24 = tpu.iota {dimensions = array<i32: 0>} : vector<16x1xi32>
    %25 = tpu.iota {dimensions = array<i32: 1>} : vector<1x128xi32>
    %c0_i32 = arith.constant 0 : i32
    %26 = vector.broadcast %c0_i32 : i32 to vector<16x1xi32>
    %27 = arith.cmpi eq, %24, %26 : vector<16x1xi32>
    %28 = vector.extract_strided_slice %13 {offsets = [1, 0], sizes = [1, 128], strides = [1, 1]} : vector<16x128xf32> to vector<1x128xf32>
    %29 = arith.subf %28, %15 : vector<1x128xf32>
    %30 = vector.shape_cast %27 : vector<16x1xi1> to vector<16x1xi1>
    %31 = vector.broadcast %30 : vector<16x1xi1> to vector<16x128xi1>
    %32 = vector.shape_cast %29 : vector<1x128xf32> to vector<1x128xf32>
    %33 = vector.broadcast %32 : vector<1x128xf32> to vector<16x128xf32>
    %34 = arith.select %31, %33, %20 : vector<16x128xi1>, vector<16x128xf32>
    %c15_i32_20 = arith.constant 15 : i32
    %35 = vector.broadcast %c15_i32_20 : i32 to vector<16x1xi32>
    %36 = arith.cmpi eq, %24, %35 : vector<16x1xi32>
    %37 = vector.extract_strided_slice %13 {offsets = [14, 0], sizes = [1, 128], strides = [1, 1]} : vector<16x128xf32> to vector<1x128xf32>
    %38 = arith.subf %17, %37 : vector<1x128xf32>
    %39 = vector.shape_cast %36 : vector<16x1xi1> to vector<16x1xi1>
    %40 = vector.broadcast %39 : vector<16x1xi1> to vector<16x128xi1>
    %41 = vector.shape_cast %38 : vector<1x128xf32> to vector<1x128xf32>
    %42 = vector.broadcast %41 : vector<1x128xf32> to vector<16x128xf32>
    %43 = arith.select %40, %42, %34 : vector<16x128xi1>, vector<16x128xf32>
    %c0_i32_21 = arith.constant 0 : i32
    %44 = vector.broadcast %c0_i32_21 : i32 to vector<1x128xi32>
    %45 = arith.cmpi eq, %25, %44 : vector<1x128xi32>
    %46 = vector.extract_strided_slice %13 {offsets = [0, 1], sizes = [16, 1], strides = [1, 1]} : vector<16x128xf32> to vector<16x1xf32>
    %47 = vector.shape_cast %45 : vector<1x128xi1> to vector<1x128xi1>
    %48 = vector.broadcast %47 : vector<1x128xi1> to vector<16x128xi1>
    %49 = vector.shape_cast %46 : vector<16x1xf32> to vector<16x1xf32>
    %50 = vector.broadcast %49 : vector<16x1xf32> to vector<16x128xf32>
    %51 = arith.select %48, %50, %23 : vector<16x128xi1>, vector<16x128xf32>
    %c127_i32_22 = arith.constant 127 : i32
    %52 = vector.broadcast %c127_i32_22 : i32 to vector<1x128xi32>
    %53 = arith.cmpi eq, %25, %52 : vector<1x128xi32>
    %54 = vector.extract_strided_slice %13 {offsets = [0, 126], sizes = [16, 1], strides = [1, 1]} : vector<16x128xf32> to vector<16x1xf32>
    %cst_23 = arith.constant 0.000000e+00 : f32
    %55 = vector.broadcast %cst_23 : f32 to vector<16x1xf32>
    %56 = arith.subf %55, %54 : vector<16x1xf32>
    %57 = vector.shape_cast %53 : vector<1x128xi1> to vector<1x128xi1>
    %58 = vector.broadcast %57 : vector<1x128xi1> to vector<16x128xi1>
    %59 = vector.shape_cast %56 : vector<16x1xf32> to vector<16x1xf32>
    %60 = vector.broadcast %59 : vector<16x1xf32> to vector<16x128xf32>
    %61 = arith.select %58, %60, %51 : vector<16x128xi1>, vector<16x128xf32>
    %62 = arith.mulf %43, %43 : vector<16x128xf32>
    %63 = arith.mulf %61, %61 : vector<16x128xf32>
    %64 = arith.addf %62, %63 : vector<16x128xf32>
    %cst_24 = arith.constant 9.99999997E-7 : f32
    %65 = vector.broadcast %cst_24 : f32 to vector<16x128xf32>
    %66 = arith.addf %64, %65 : vector<16x128xf32>
    %67 = math.sqrt %66 : vector<16x128xf32>
    %c0_25 = arith.constant 0 : index
    %c0_26 = arith.constant 0 : index
    %c0_27 = arith.constant 0 : index
    %c0_28 = arith.constant 0 : index
    %68 = vector.load %arg4[%c0_25, %c0_26, %c0_27, %c0_28] : memref<1x1x16x128xf32, #tpu.memory_space<vmem>>, vector<1x1x16x128xf32>
    %69 = vector.shape_cast %68 : vector<1x1x16x128xf32> to vector<16x128xf32>
    %70 = vector.shape_cast %67 : vector<16x128xf32> to vector<1x1x16x128xf32>
    tpu.vector_store %arg4[%c0_25, %c0_26, %c0_27, %c0_28], %70 {strides = array<i32>} : memref<1x1x16x128xf32, #tpu.memory_space<vmem>>, vector<1x1x16x128xf32>,
    return
  }
  func.func @transform_0(%arg0: i32, %arg1: i32) -> (i32, i32, i32, i32) {
    %c0_i32 = arith.constant 0 : i32
    %c0_i32_0 = arith.constant 0 : i32
    %c0_i32_1 = arith.constant 0 : i32
    return %arg0, %c0_i32, %arg1, %c0_i32_0 : i32, i32, i32, i32
  }
  func.func @transform_1(%arg0: i32, %arg1: i32) -> (i32, i32, i32, i32) {
    %c0_i32 = arith.constant 0 : i32
    %c0_i32_0 = arith.constant 0 : i32
    %c0_i32_1 = arith.constant 0 : i32
    return %arg0, %arg1, %c0_i32, %c0_i32_0 : i32, i32, i32, i32
  }
  func.func @transform_2(%arg0: i32, %arg1: i32) -> (i32, i32, i32, i32) {
    %c0_i32 = arith.constant 0 : i32
    %c0_i32_0 = arith.constant 0 : i32
    %c0_i32_1 = arith.constant 0 : i32
    return %arg0, %c0_i32, %arg1, %c0_i32_0 : i32, i32, i32, i32
  }
}

</mosaic_0001>

<llo_original>
// kernel: tpu_custom_call.1
$region0: #{tpu_custom_call.1}
  #allocation0 [shape = 'u32[]', space=smem, size = 0x4, offset = 0x4, fixed_abs, tag = 'smem constant byte address 0x4 - core index']
  #allocation1 [shape = 'u32[144,128]{1,0:T(1,128)}', space=vmem, size = 0x12000, scoped, tag = 'internal scratch']
  %s0 = inlined_call_operand.hbm [shape: f32[2,3,16,128], index: 0, kind: input, shape index: {}]
  %s1 = inlined_call_operand.hbm [shape: f32[2,1,8,128], index: 1, kind: input, shape index: {}]
  %s2 = inlined_call_operand.hbm [shape: f32[2,1,16,128], index: 2, kind: output, shape index: {}]
  %s3 = sld [smem:[#allocation0]]
  $region49: #{tpu_custom_call.1} parent=0
    _
  %s5 = ssub.s32 1, %s3
  %s6 = scalar_select 0, %s5, %s3
  $region1: #{tpu_custom_call.1} parent=0
    #allocation2 [shape = 'u8[49152]{0}', space=vmem, size = 0xc000, scoped, tag = 'input window, operand 0']
    #allocation3 [shape = 's32[2]{0}', space=sflag, size = 0x8, scoped, tag = 'scoped memory for tpu_custom_call.1']
    #allocation4 [shape = 's32[2]{0}', space=sflag, size = 0x8, scoped, tag = 'scoped memory for tpu_custom_call.1']
    #allocation5 [shape = 'u8[8192]{0}', space=vmem, size = 0x2000, scoped, tag = 'input window, operand 1']
    #allocation6 [shape = 's32[2]{0}', space=sflag, size = 0x8, scoped, tag = 'scoped memory for tpu_custom_call.1']
    #allocation7 [shape = 'u8[16384]{0}', space=vmem, size = 0x4000, scoped, tag = 'output window, operand 0']
    %7 = vsyncpa [#allocation3], 0
    %s8 = scalar_lea.sflag [#allocation3], 1
    %9 = vsyncpa %s8, 0
    %10 = vsyncpa [#allocation6], 0
    %s11 = scalar_lea.sflag [#allocation6], 1
    %12 = vsyncpa %s11, 0
    %13 = vsyncpa [#allocation4], 0
    %s14 = scalar_lea.sflag [#allocation4], 1
    %15 = vsyncpa %s14, 0
    loop: start=0, step=1, limit=4
    $region2: #{tpu_custom_call.1} parent=1 // loop_pre_header
      _
    $region3: #{tpu_custom_call.1} parent=1 // loop_header
      %s17 = sphi 0, %s21
      %p18 = scmp.ge.s32.totalorder %s17, 4
      %s24 = sphi 0, %s36
      %s25 = sphi 0, %s32
      %s26 = sphi 0, %s24
      %s27 = sphi 0, %s25
      %s28 = sphi 0, %s26
      %s29 = sphi 0, %s27
      %s41 = sphi 0, %s43
      %s44 = sphi 0, %s41
      %s45 = sphi 0, %s44
      %s61 = sphi 0, %s45
      %s69 = sphi 0, %s71
      %s72 = sphi 0, %s69
      %s73 = sphi 0, %s72
      %s89 = sphi 0, %s73
      %s97 = sphi 0, %s99
      %s100 = sphi 0, %s97
      %s101 = sphi 0, %s100
      %s117 = sphi 0, %s101
    $region4: #{tpu_custom_call.1} parent=1 // loop_header_branch
      %20 = sbr.rel (%p18) target = $region8
    $region5: #{tpu_custom_call.1} parent=1 // loop_body
      %s22 = ssub.s32 %s17, 1
      %s23 = ssub.s32 %s17, 2
      %s30 = sadd.s32 1, %s25
      %p31 = scmp.ge.s32.totalorder %s30, 1
      %s32 = scalar_select %p31, 0, %s30
      %s33 = sadd.s32 1, %s24
      %s34 = scalar_select %p31, %s33, %s24
      %p35 = scmp.ge.s32.totalorder %s34, 2
      %s36 = scalar_select %p35, 0, %s34
      %s37 = ssub.s32 %s24, %s36
      %s38 = ssub.s32 %s25, %s32
      %s39 = sor.u32 %s37, %s38
      %p40 = scmp.eq.s32.totalorder %s39, 0
      %s42 = sadd.s32 %s41, 1
      %s43 = scalar_select %p40, %s41, %s42
      %p46 = pneg %p40
      %p47 = scmp.eq.s32.totalorder %s17, 1
      %p48 = por %p46, %p47
      %p49 = scmp.ne.s32.totalorder %s41, %s44
      %p50 = scmp.eq.s32.totalorder %s17, 0
      %p51 = por %p49, %p50
      %p52 = scmp.ne.s32.totalorder %s41, %s44
      %p53 = scmp.eq.s32.totalorder %s22, 1
      %p54 = por %p52, %p53
      %p55 = scmp.ne.s32.totalorder %s44, %s45
      %p56 = scmp.eq.s32.totalorder %s22, 0
      %p57 = por %p55, %p56
      %p58 = scmp.ne.s32.totalorder %s44, %s45
      %p59 = scmp.eq.s32.totalorder %s23, 1
      %p60 = por %p58, %p59
      %p62 = scmp.ne.s32.totalorder %s45, %s61
      %p63 = scmp.eq.s32.totalorder %s23, 0
      %p64 = por %p62, %p63
      %s65 = ssub.s32 %s24, %s36
      %s66 = ssub.s32 %s25, %s32
      %s67 = sor.u32 %s65, %s66
      %p68 = scmp.eq.s32.totalorder %s67, 0
      %s70 = sadd.s32 %s69, 1
      %s71 = scalar_select %p68, %s69, %s70
      %p74 = pneg %p68
      %p75 = scmp.eq.s32.totalorder %s17, 1
      %p76 = por %p74, %p75
      %p77 = scmp.ne.s32.totalorder %s69, %s72
      %p78 = scmp.eq.s32.totalorder %s17, 0
      %p79 = por %p77, %p78
      %p80 = scmp.ne.s32.totalorder %s69, %s72
      %p81 = scmp.eq.s32.totalorder %s22, 1
      %p82 = por %p80, %p81
      %p83 = scmp.ne.s32.totalorder %s72, %s73
      %p84 = scmp.eq.s32.totalorder %s22, 0
      %p85 = por %p83, %p84
      %p86 = scmp.ne.s32.totalorder %s72, %s73
      %p87 = scmp.eq.s32.totalorder %s23, 1
      %p88 = por %p86, %p87
      %p90 = scmp.ne.s32.totalorder %s73, %s89
      %p91 = scmp.eq.s32.totalorder %s23, 0
      %p92 = por %p90, %p91
      %s93 = ssub.s32 %s24, %s36
      %s94 = ssub.s32 %s25, %s32
      %s95 = sor.u32 %s93, %s94
      %p96 = scmp.eq.s32.totalorder %s95, 0
      %s98 = sadd.s32 %s97, 1
      %s99 = scalar_select %p96, %s97, %s98
      %p102 = pneg %p96
      %p103 = scmp.eq.s32.totalorder %s17, 1
      %p104 = por %p102, %p103
      %p105 = scmp.ne.s32.totalorder %s97, %s100
      %p106 = scmp.eq.s32.totalorder %s17, 0
      %p107 = por %p105, %p106
      %p108 = scmp.ne.s32.totalorder %s97, %s100
      %p109 = scmp.eq.s32.totalorder %s22, 1
      %p110 = por %p108, %p109
      %p111 = scmp.ne.s32.totalorder %s100, %s101
      %p112 = scmp.eq.s32.totalorder %s22, 0
      %p113 = por %p111, %p112
      %p114 = scmp.ne.s32.totalorder %s100, %s101
      %p115 = scmp.eq.s32.totalorder %s23, 1
      %p116 = por %p114, %p115
      %p118 = scmp.ne.s32.totalorder %s101, %s117
      %p119 = scmp.eq.s32.totalorder %s23, 0
      %p120 = por %p118, %p119
      %p121 = scmp.le.s32.totalorder 1, %s17
      %p122 = scmp.lt.s32.totalorder %s17, 3
      %p123 = pnand %p121, %p122
      %p124 = pneg %p123
      // Predicated region
      $region9: #{tpu_custom_call.1} parent=5 // pred_check
        _
      $region10: #{tpu_custom_call.1} parent=5 // pred_check_branch
        %126 = sbr.rel (%p123) target = $region12
      $region11: #{tpu_custom_call.1} parent=5 // pred_region
        %s127 = ssub.s32 %s17, 1
      $region12: #{tpu_custom_call.1} parent=5 // pred_fallthru
        _
      %p128 = scmp.lt.s32.totalorder %s17, 2
      // Predicated region
      $region13: #{tpu_custom_call.1} parent=5 // pred_check
        %p129 = pneg %p128
      $region14: #{tpu_custom_call.1} parent=5 // pred_check_branch
        %131 = sbr.rel (%p129) target = $region16
      $region15: #{tpu_custom_call.1} parent=5 // pred_region
        // Predicated region
        $region17: #{tpu_custom_call.1} parent=15 // pred_check
          %p132 = pneg %p51
        $region18: #{tpu_custom_call.1} parent=15 // pred_check_branch
          %134 = sbr.rel (%p132) target = $region20
        $region19: #{tpu_custom_call.1} parent=15 // pred_region
          %s135 = sand.u32 %s41, 1
          %s136 = scalar_lea.sflag [#allocation3], %s135
          %s137 = sand.u32 %s41, 1
          %s138 = smul.addr %s137, 48
          %s139 = scalar_lea.vmem [#allocation2], %s138
          %s140 = smul.u32 2, %s25
          %s142 = ssub.s32 768, 768
          %143 = vsyncadd %s136, %s142
          %s144 = smul.addr %s24, 6
          %s145 = sadd.s32 %s140, %s144
          %s146 = smul.addr %s145, 128
          %s147 = scalar_lea.hbm %s0, %s146
          %s148 = sshll.u32 %s139, 4
          %s149 = int_to_ptr.vmem [resolvable:$true] %s148
          %154 = dma.hbm_to_vmem [thread:$0]  %s147, 768, %s149, %s136, 128, 128, 8
        $region20: #{tpu_custom_call.1} parent=15 // pred_fallthru
          _
        // Predicated region
        $region21: #{tpu_custom_call.1} parent=15 // pred_check
          %p155 = pneg %p79
        $region22: #{tpu_custom_call.1} parent=15 // pred_check_branch
          %157 = sbr.rel (%p155) target = $region24
        $region23: #{tpu_custom_call.1} parent=15 // pred_region
          %s158 = sand.u32 %s69, 1
          %s159 = scalar_lea.sflag [#allocation6], %s158
          %s160 = sand.u32 %s69, 1
          %s161 = smul.addr %s160, 8
          %s162 = scalar_lea.vmem [#allocation5], %s161
          %s164 = ssub.s32 128, 128
          %165 = vsyncadd %s159, %s164
          %s166 = sadd.s32 %s25, %s24
          %s167 = smul.addr %s166, 128
          %s168 = scalar_lea.hbm %s1, %s167
          %s170 = sshll.u32 %s162, 4
          %s171 = int_to_ptr.vmem [resolvable:$true] %s170
          %173 = dma.hbm_to_vmem [thread:$0]  %s168, 128, %s171, %s159
        $region24: #{tpu_custom_call.1} parent=15 // pred_fallthru
          _
      $region16: #{tpu_custom_call.1} parent=5 // pred_fallthru
        _
      %p174 = scmp.le.s32.totalorder 1, %s17
      %p175 = scmp.lt.s32.totalorder %s17, 3
      %p176 = pnand %p174, %p175
      %p177 = pneg %p176
      // Predicated region
      $region25: #{tpu_custom_call.1} parent=5 // pred_check
        _
      $region26: #{tpu_custom_call.1} parent=5 // pred_check_branch
        %179 = sbr.rel (%p176) target = $region28
      $region27: #{tpu_custom_call.1} parent=5 // pred_region
        %s180 = ssub.s32 %s17, 1
        %s181 = sand.u32 %s44, 1
        %s182 = scalar_lea.sflag [#allocation3], %s181
        %s183 = sand.u32 %s44, 1
        %s184 = smul.addr %s183, 48
        %s185 = scalar_lea.vmem [#allocation2], %s184
        // Predicated region
        $region29: #{tpu_custom_call.1} parent=27 // pred_check
          %p186 = pneg %p57
        $region30: #{tpu_custom_call.1} parent=27 // pred_check_branch
          %188 = sbr.rel (%p186) target = $region32
        $region31: #{tpu_custom_call.1} parent=27 // pred_region
          %189 = dma.done %s182, 768
        $region32: #{tpu_custom_call.1} parent=27 // pred_fallthru
          _
        %s190 = sand.u32 %s72, 1
        %s191 = scalar_lea.sflag [#allocation6], %s190
        %s192 = sand.u32 %s72, 1
        %s193 = smul.addr %s192, 8
        %s194 = scalar_lea.vmem [#allocation5], %s193
        // Predicated region
        $region33: #{tpu_custom_call.1} parent=27 // pred_check
          %p195 = pneg %p85
        $region34: #{tpu_custom_call.1} parent=27 // pred_check_branch
          %197 = sbr.rel (%p195) target = $region36
        $region35: #{tpu_custom_call.1} parent=27 // pred_region
          %198 = dma.done %s191, 128
        $region36: #{tpu_custom_call.1} parent=27 // pred_fallthru
          _
        %s199 = sand.u32 %s44, 1
        %s200 = scalar_lea.sflag [#allocation3], %s199
        %s201 = sand.u32 %s44, 1
        %s202 = smul.addr %s201, 48
        %s203 = scalar_lea.vmem [#allocation2], %s202
        %p204 = pneg %p57
        %p205 = pneg %p54
        %s206 = sand.u32 %s72, 1
        %s207 = scalar_lea.sflag [#allocation6], %s206
        %s208 = sand.u32 %s72, 1
        %s209 = smul.addr %s208, 8
        %s210 = scalar_lea.vmem [#allocation5], %s209
        %p211 = pneg %p85
        %p212 = pneg %p82
        %p213 = pneg %p113
        %p214 = pneg %p110
        %s215 = sand.u32 %s100, 1
        %s216 = scalar_lea.sflag [#allocation4], %s215
        %s217 = sand.u32 %s100, 1
        %s218 = smul.addr %s217, 16
        %s219 = scalar_lea.vmem [#allocation7], %s218
        %s220 = smul.u32 2, %s27
        %s221 = smul.u32 2, %s27
        %v222 = vld [vmem:[%s185] sm:$0xff]
        %v223 = vld [vmem:[%s185 + $0x8] sm:$0xff]
        %v224 = vmul.f32 %v222, 0.25678906
        %v225 = vmul.f32 %v223, 0.25678906
        %s226 = scalar_lea.vmem %s185, 16 [#allocation2]
        %v227 = vld [vmem:[%s226] sm:$0xff]
        %v228 = vld [vmem:[%s226 + $0x8] sm:$0xff]
        %v229 = vmul.f32 %v227, 0.50412893
        %v230 = vmul.f32 %v228, 0.50412893
        %v231 = vadd.f32 %v224, %v229
        %v232 = vadd.f32 %v225, %v230
        %s233 = scalar_lea.vmem %s185, 32 [#allocation2]
        %v234 = vld [vmem:[%s233] sm:$0xff]
        %v235 = vld [vmem:[%s233 + $0x8] sm:$0xff]
        %v236 = vmul.f32 %v234, 0.09790625
        %v237 = vmul.f32 %v235, 0.09790625
        %v238 = vadd.f32 %v231, %v236
        %v239 = vadd.f32 %v232, %v237
        %v240 = vld [vmem:[%s194] sm:$0x1]
        %v241 = vld [vmem:[%s194 + $0x1] sm:$0x1]
        %v242 = vrot.slane %v238, 1
        %v243 = vrot.slane %v239, 1
        %v244 = vlaneseq
        %v245 = vshrl.u32 %v244, 7
        %vm246 = vcmp.lt.s32.totalorder %v245, 7
        %v247 = vsel %vm246, %v242, %v243
        %v248 = vsel %vm246, %v243, %v242
        %v249 = vrot.slane %v238, 7
        %v250 = vrot.slane %v239, 7
        %vm251 = vcmp.lt.s32.totalorder %v245, 1
        %v252 = vsel %vm251, %v249, %v250
        %v253 = vsel %vm251, %v250, %v249
        %v254 = vsub.f32 %v247, %v253
        %v255 = vsub.f32 %v248, %v252
        %256 = vrot.lane.b32.xlu0 %v238, 127
        %v257 = vpop.permute.xlu0 %256
        %258 = vrot.lane.b32.xlu0 %v239, 127
        %v259 = vpop.permute.xlu0 %258
        %260 = vrot.lane.b32.xlu0 %v238, 1
        %v261 = vpop.permute.xlu0 %260
        %262 = vrot.lane.b32.xlu0 %v239, 1
        %v263 = vpop.permute.xlu0 %262
        %v264 = vsub.f32 %v257, %v261
        %v265 = vsub.f32 %v259, %v263
        %v266 = vadd.s32 %v245, 8
        %v267 = vlaneseq
        %v268 = vand.u32 %v267, 127
        %vm269 = vcmp.eq.s32.totalorder %v245, 0
        %vm270 = vcmp.eq.s32.totalorder %v266, 0
        %v272 = vrot.slane %v240, 7
        %v274 = vsub.f32 %v238, %v272
        %v275 = vsel %vm269, 1, 0
        %v276 = vsel %vm270, 1, 0
        %vm277 = vcmp.eq.s32.totalorder %v275, 1
        %vm278 = vcmp.eq.s32.totalorder %v276, 1
        %v279 = vlaneseq
        %v280 = vshrl.u32 %v279, 7
        %v281 = vsub.s32 1, %v280
        %v282 = vrot.slane %v274, %v281
        %v283 = vsel %vm277, %v282, %v254
        %v284 = vsel %vm278, %v282, %v255
        %vm285 = vcmp.eq.s32.totalorder %v245, 15
        %vm286 = vcmp.eq.s32.totalorder %v266, 15
        %v288 = vrot.slane %v239, 6
        %v290 = vsub.f32 %v241, %v288
        %v291 = vsel %vm285, 1, 0
        %v292 = vsel %vm286, 1, 0
        %vm293 = vcmp.eq.s32.totalorder %v291, 1
        %vm294 = vcmp.eq.s32.totalorder %v292, 1
        %v295 = vlaneseq
        %v296 = vshrl.u32 %v295, 7
        %v297 = vsub.s32 0, %v296
        %v298 = vrot.slane %v290, %v297
        %v299 = vsel %vm293, %v298, %v283
        %v300 = vsel %vm294, %v298, %v284
        %vm301 = vcmp.eq.s32.totalorder %v268, 0
        %v302 = vsel %vm301, 1, 0
        %vm303 = vcmp.eq.s32.totalorder %v302, 1
        %305 = vset.pattern.permute.xlu0 1
        %306 = vperm.xlu0 %305, %v238
        %v307 = vpop.permute.xlu0 %306
        %309 = vset.pattern.permute.xlu0 1
        %310 = vperm.xlu0 %309, %v239
        %v311 = vpop.permute.xlu0 %310
        %v313 = vsel %vm303, %v307, %v264
        %v314 = vsel %vm303, %v311, %v265
        %vm315 = vcmp.eq.s32.totalorder %v268, 127
        %v316 = vsub.f32 0.0, %v238
        %v317 = vsub.f32 0.0, %v239
        %v318 = vsel %vm315, 1, 0
        %vm319 = vcmp.eq.s32.totalorder %v318, 1
        %321 = vset.pattern.permute.xlu0 126
        %322 = vperm.xlu0 %321, %v316
        %v323 = vpop.permute.xlu0 %322
        %326 = vset.pattern.permute.xlu0 126
        %327 = vperm.xlu0 %326, %v317
        %v328 = vpop.permute.xlu0 %327
        %v330 = vsel %vm319, %v323, %v313
        %v331 = vsel %vm319, %v328, %v314
        %v332 = vmul.f32 %v299, %v299
        %v333 = vmul.f32 %v300, %v300
        %v334 = vmul.f32 %v330, %v330
        %v335 = vmul.f32 %v331, %v331
        %v336 = vadd.f32 %v332, %v334
        %v337 = vadd.f32 %v333, %v335
        %v338 = vadd.f32 %v336, 1e-06
        %v339 = vadd.f32 %v337, 1e-06
        %v340 = vrsqrt.pop %v338
        %v341 = vmul.f32 %v338, %v340
        %vm342 = vcmp.eq.f32.partialorder %v338, inf
        %v343 = vsel %vm342, %v338, %v341
        %vm344 = vcmp.eq.f32.partialorder %v338, 0.0
        %v345 = vand.u32 %v338, 2147483648
        %v346 = vsel %vm344, %v345, %v343
        %v347 = vrsqrt.pop %v339
        %v348 = vmul.f32 %v339, %v347
        %vm349 = vcmp.eq.f32.partialorder %v339, inf
        %v350 = vsel %vm349, %v339, %v348
        %vm351 = vcmp.eq.f32.partialorder %v339, 0.0
        %v352 = vand.u32 %v339, 2147483648
        %v353 = vsel %vm351, %v352, %v350
        %354 = vst [vmem:[%s219] sm:$0xff] %v346
        %355 = vst [vmem:[%s219 + $0x8] sm:$0xff] %v353
        %s356 = sand.u32 %s100, 1
        %s357 = scalar_lea.sflag [#allocation4], %s356
        %s358 = sand.u32 %s100, 1
        %s359 = smul.addr %s358, 16
        %s360 = scalar_lea.vmem [#allocation7], %s359
        // Predicated region
        $region37: #{tpu_custom_call.1} parent=27 // pred_check
          %p361 = pneg %p110
        $region38: #{tpu_custom_call.1} parent=27 // pred_check_branch
          %363 = sbr.rel (%p361) target = $region40
        $region39: #{tpu_custom_call.1} parent=27 // pred_region
          %s364 = smul.u32 2, %s27
          %s366 = ssub.s32 256, 256
          %367 = vsyncadd %s357, %s366
          %s368 = smul.addr %s26, 2
          %s369 = sadd.s32 %s364, %s368
          %s370 = smul.addr %s369, 128
          %s371 = scalar_lea.hbm %s2, %s370
          %s372 = sshll.u32 %s360, 4
          %s373 = int_to_ptr.vmem [resolvable:$true] %s372
          %378 = dma.vmem_to_hbm [thread:$0]  %s373, 256, %s371, %s357, 128, 128, 8
        $region40: #{tpu_custom_call.1} parent=27 // pred_fallthru
          _
      $region28: #{tpu_custom_call.1} parent=5 // pred_fallthru
        _
      %p379 = scmp.le.s32.totalorder 2, %s17
      // Predicated region
      $region41: #{tpu_custom_call.1} parent=5 // pred_check
        %p380 = pneg %p379
      $region42: #{tpu_custom_call.1} parent=5 // pred_check_branch
        %382 = sbr.rel (%p380) target = $region44
      $region43: #{tpu_custom_call.1} parent=5 // pred_region
        %s383 = ssub.s32 %s17, 2
        // Predicated region
        $region45: #{tpu_custom_call.1} parent=43 // pred_check
          %p384 = pneg %p116
        $region46: #{tpu_custom_call.1} parent=43 // pred_check_branch
          %386 = sbr.rel (%p384) target = $region48
        $region47: #{tpu_custom_call.1} parent=43 // pred_region
          %s387 = sand.u32 %s101, 1
          %s388 = scalar_lea.sflag [#allocation4], %s387
          %s389 = sand.u32 %s101, 1
          %s390 = smul.addr %s389, 16
          %s391 = scalar_lea.vmem [#allocation7], %s390
          %392 = dma.done %s388, 256
        $region48: #{tpu_custom_call.1} parent=43 // pred_fallthru
          _
      $region44: #{tpu_custom_call.1} parent=5 // pred_fallthru
        _
    $region6: #{tpu_custom_call.1} parent=1 // loop_footer
      %s21 = sadd.s32 1, %s17
    $region7: #{tpu_custom_call.1} parent=1 // loop_footer_branch
      %16 = sbr.rel target = $region3
    $region8: #{tpu_custom_call.1} parent=1 // loop_exit
      _
    %393 = vsyncpa [#allocation3], 1
    %s394 = scalar_lea.sflag [#allocation3], 1
    %395 = vsyncpa %s394, 1
    %396 = vsyncpa [#allocation6], 1
    %s397 = scalar_lea.sflag [#allocation6], 1
    %398 = vsyncpa %s397, 1
    %399 = vsyncpa [#allocation4], 1
    %s400 = scalar_lea.sflag [#allocation4], 1
    %401 = vsyncpa %s400, 1

</llo_original>
